<compile_context>
chip_gen: v7x
topology: tpu7x:2x2x1
jax: 0.10.0
libtpu: 0.0.40
codegen_flags: <defaults>
</compile_context>

<pallas_src>
import functools

import jax
import jax.numpy as jnp
from jax.experimental import pallas as pl
from jax.experimental.pallas import tpu as pltpu


def _w3_kernel(h2_ref, w3_ref, b3_ref, out_ref):
    # Single MXU push per grid step: (B, 64) @ (64, tn) + b3, f32 accumulate.
    y = jnp.dot(h2_ref[...], w3_ref[...], preferred_element_type=jnp.float32)
    out_ref[...] = (y + b3_ref[...]).astype(out_ref.dtype)


def _round_up(x, m):
    return (x + m - 1) // m * m


def _choose_tile(d_out, tn_max, min_steps):
    """Pick a lane-aligned (multiple-of-128) column tile.

    Priority: (1) minimal padding of D_out (zero wasted W3 bandwidth when
    possible), (2) fewest grid steps (largest tile) among the minimizers.
    A soft cap keeps the grid at >= min_steps steps when D_out is large
    enough, so the parallel grid axis can be sharded across TensorCores.
    """
    d128 = _round_up(d_out, 128)
    cap = max(128, _round_up(pl.cdiv(d128, max(1, min_steps)), 128))
    cap = min(cap, max(128, (tn_max // 128) * 128), d128)
    best_tn, best_pad, best_steps = 128, None, None
    for tn in range(128, cap + 1, 128):
        steps = pl.cdiv(d128, tn)
        pad = steps * tn - d_out
        if (best_pad is None or pad < best_pad
                or (pad == best_pad and steps < best_steps)):
            best_tn, best_pad, best_steps = tn, pad, steps
    return best_tn


@functools.partial(jax.jit, static_argnames=("tn_max", "min_steps", "w3_dtype"))
def attention2weights_forward(proto, params, *, tn_max=4096, min_steps=4,
                              w3_dtype=None):
    """proto: (B, in_channel) f32 -> (B, out_channel*256*k*k) f32."""
    w1, b1, w2, b2, w3, b3 = params
    B = proto.shape[0]
    d_out = w3.shape[1]

    # ---- layers 1 & 2 hoisted out of the kernel (tiny, fused by XLA) ----
    h1 = jnp.maximum(jnp.dot(proto, w1, preferred_element_type=jnp.float32) + b1, 0.0)
    h2 = jnp.maximum(jnp.dot(h1, w2, preferred_element_type=jnp.float32) + b2, 0.0)

    # Optional low-precision streaming of the dominant W3 byte stream.
    if w3_dtype is not None:
        w3 = w3.astype(w3_dtype)
        h2 = h2.astype(w3_dtype)

    # ---- choose column tile, pad D_out to a multiple of it ----
    tn = _choose_tile(d_out, tn_max, min_steps)
    d_pad = _round_up(d_out, tn)
    if d_pad != d_out:
        w3 = jnp.pad(w3, ((0, 0), (0, d_pad - d_out)))
        b3 = jnp.pad(b3, ((0, 0), (0, d_pad - d_out)))

    grid = (d_pad // tn,)

    w3_bytes = w3.size * jnp.dtype(w3.dtype).itemsize
    h2_bytes = h2.size * jnp.dtype(h2.dtype).itemsize
    b3_bytes = b3.size * jnp.dtype(b3.dtype).itemsize
    cost = pl.CostEstimate(
        flops=2 * B * 64 * d_pad,
        transcendentals=0,
        bytes_accessed=w3_bytes + h2_bytes + b3_bytes + B * d_pad * 4,
    )

    out = pl.pallas_call(
        _w3_kernel,
        out_shape=jax.ShapeDtypeStruct((B, d_pad), jnp.float32),
        grid_spec=pltpu.PrefetchScalarGridSpec(
            num_scalar_prefetch=0,
            grid=grid,
            in_specs=[
                # h2 is grid-invariant and tiny; W3/b3 stream column tiles.
                # TODO(synk): add pipeline_mode=pl.Buffered(3) on the W3 spec if
                # a profile still shows exposed DMA after the larger tile.
                pl.BlockSpec((B, 64), lambda j: (0, 0)),     # h2 (full)
                pl.BlockSpec((64, tn), lambda j: (0, j)),    # W3 column tile
                pl.BlockSpec((1, tn), lambda j: (0, j)),     # b3 column tile
            ],
            out_specs=pl.BlockSpec((B, tn), lambda j: (0, j)),
        ),
        compiler_params=pltpu.CompilerParams(
            dimension_semantics=("parallel",)),
        cost_estimate=cost,
    )(h2, w3, b3)

    return out[:, :d_out] if d_pad != d_out else out


def init_params(key, in_channel, out_channel, kernel_size=3):
    d_out = out_channel * 256 * kernel_size * kernel_size
    ks = jax.random.split(key, 6)
    scale = 0.05
    w1 = scale * jax.random.normal(ks[0], (in_channel, 128), jnp.float32)
    b1 = scale * jax.random.normal(ks[1], (1, 128), jnp.float32)
    w2 = scale * jax.random.normal(ks[2], (128, 64), jnp.float32)
    b2 = scale * jax.random.normal(ks[3], (1, 64), jnp.float32)
    w3 = scale * jax.random.normal(ks[4], (64, d_out), jnp.float32)
    b3 = scale * jax.random.normal(ks[5], (1, d_out), jnp.float32)
    return (w1, b1, w2, b2, w3, b3)


def reference_forward(proto, params):
    w1, b1, w2, b2, w3, b3 = params
    h1 = jnp.maximum(proto @ w1 + b1, 0.0)
    h2 = jnp.maximum(h1 @ w2 + b2, 0.0)
    return h2 @ w3 + b3


if __name__ == "__main__":
    key = jax.random.PRNGKey(0)
    k_param, k_x = jax.random.split(key)

    in_channel = 4       # number of "proto" features
    out_channel = 1      # -> D_out = 1 * 256 * 3 * 3 = 2304
    kernel_size = 3
    B = 8                # batch of proto vectors

    params = init_params(k_param, in_channel, out_channel, kernel_size)
    proto = jax.random.normal(k_x, (B, in_channel), jnp.float32)
    d_out = out_channel * 256 * kernel_size * kernel_size
    ref = reference_forward(proto, params)

    # Exact f32 path (matches the PyTorch module semantics).
    out = jax.block_until_ready(attention2weights_forward(proto, params))
    assert out.shape == (B, d_out)
    assert jnp.allclose(out, ref, atol=1e-4, rtol=1e-4)

    # bf16-streamed W3 path (halves the dominant HBM byte stream).
    out_bf16 = jax.block_until_ready(
        attention2weights_forward(proto, params, w3_dtype=jnp.bfloat16))
    assert out_bf16.shape == (B, d_out)
    assert jnp.allclose(out_bf16, ref, atol=1e-2, rtol=1e-2)

    print("KERNEL_OK")
</pallas_src>

<mosaic_0001>
module attributes {stable_mosaic.version = 11 : i64} {
  func.func @_w3_kernel(%arg0: i32, %arg1: memref<8x64xf32, #tpu.memory_space<vmem>>, %arg2: memref<64x384xf32, #tpu.memory_space<vmem>>, %arg3: memref<1x384xf32, #tpu.memory_space<vmem>>, %arg4: memref<8x384xf32, #tpu.memory_space<vmem>>) attributes {dimension_semantics = [#tpu.dimension_semantics<parallel>], iteration_bounds = array<i64: 6>, scalar_prefetch = 0 : i64, scratch_operands = 0 : i64, tpu.core_type = #tpu.core_type<tc>, window_params = [{pipeline_mode = #tpu.pipeline_mode<synchronous>, transform_indices = @transform_0, window_bounds = array<i64: 8, 64>}, {transform_indices = @transform_1, window_bounds = array<i64: 64, 384>}, {transform_indices = @transform_2, window_bounds = array<i64: 1, 384>}, {transform_indices = @transform_3, window_bounds = array<i64: 8, 384>}]} {
    %c0 = arith.constant 0 : index
    %c0_0 = arith.constant 0 : index
    %0 = vector.load %arg1[%c0, %c0_0] : memref<8x64xf32, #tpu.memory_space<vmem>>, vector<8x64xf32>
    %c0_1 = arith.constant 0 : index
    %c0_2 = arith.constant 0 : index
    %1 = vector.load %arg2[%c0_1, %c0_2] : memref<64x384xf32, #tpu.memory_space<vmem>>, vector<64x384xf32>
    %cst = arith.constant dense<0.000000e+00> : vector<8x384xf32>
    %2 = tpu.matmul %0, %1, %cst {dimension_numbers = #tpu.dot_dimension_numbers<[1], [0], [0], [1], [0, 0, 1, 1], [], []>} : vector<8x64xf32>, vector<64x384xf32>, vector<8x384xf32> -> vector<8x384xf32>
    %c0_3 = arith.constant 0 : index
    %c0_4 = arith.constant 0 : index
    %3 = vector.load %arg3[%c0_3, %c0_4] : memref<1x384xf32, #tpu.memory_space<vmem>>, vector<1x384xf32>
    %4 = vector.broadcast %3 : vector<1x384xf32> to vector<8x384xf32>
    %5 = arith.addf %2, %4 : vector<8x384xf32>
    %c0_5 = arith.constant 0 : index
    %c0_6 = arith.constant 0 : index
    %6 = vector.load %arg4[%c0_5, %c0_6] : memref<8x384xf32, #tpu.memory_space<vmem>>, vector<8x384xf32>
    tpu.vector_store %arg4[%c0_5, %c0_6], %5 {strides = array<i32>} : memref<8x384xf32, #tpu.memory_space<vmem>>, vector<8x384xf32>,
    return
  }
  func.func @transform_0(%arg0: i32) -> (i32, i32) {
    %c0_i32 = arith.constant 0 : i32
    %c0_i32_0 = arith.constant 0 : i32
    %c0_i32_1 = arith.constant 0 : i32
    return %c0_i32, %c0_i32_0 : i32, i32
  }
  func.func @transform_1(%arg0: i32) -> (i32, i32) {
    %c0_i32 = arith.constant 0 : i32
    %c0_i32_0 = arith.constant 0 : i32
    return %c0_i32, %arg0 : i32, i32
  }
  func.func @transform_2(%arg0: i32) -> (i32, i32) {
    %c0_i32 = arith.constant 0 : i32
    %c0_i32_0 = arith.constant 0 : i32
    return %c0_i32, %arg0 : i32, i32
  }
  func.func @transform_3(%arg0: i32) -> (i32, i32) {
    %c0_i32 = arith.constant 0 : i32
    %c0_i32_0 = arith.constant 0 : i32
    return %c0_i32, %arg0 : i32, i32
  }
}

</mosaic_0001>

<llo_original>
// kernel: attention2weights_forward.1
$region0: #{attention2weights_forward.1}
  #allocation0 [shape = 'u32[]', space=smem, size = 0x4, offset = 0x4, fixed_abs, tag = 'smem constant byte address 0x4 - core index']
  #allocation1 [shape = 'u32[144,128]{1,0:T(1,128)}', space=vmem, size = 0x12000, scoped, tag = 'internal scratch']
  %s0 = inlined_call_operand.vmem [shape: f32[8,64], index: 0, kind: input, shape index: {}]
  %s1 = inlined_call_operand.hbm [shape: f32[64,2304], index: 1, kind: input, shape index: {}]
  %s2 = inlined_call_operand.vmem [shape: f32[1,2304], index: 2, kind: input, shape index: {}]
  %s3 = inlined_call_operand.hbm [shape: f32[8,2304], index: 3, kind: output, shape index: {}]
  %s4 = sld [smem:[#allocation0]]
  $region49: #{attention2weights_forward.1} parent=0
    _
  %s6 = ssub.s32 1, %s4
  %s7 = scalar_select 0, %s6, %s4
  $region1: #{attention2weights_forward.1} parent=0
    #allocation2 [shape = 'u8[196608]{0}', space=vmem, size = 0x30000, scoped, tag = 'input window, operand 1']
    #allocation3 [shape = 's32[2]{0}', space=sflag, size = 0x8, scoped, tag = 'scoped memory for attention2weights_forward.1']
    #allocation4 [shape = 's32[2]{0}', space=sflag, size = 0x8, scoped, tag = 'scoped memory for attention2weights_forward.1']
    #allocation5 [shape = 'u8[24576]{0}', space=vmem, size = 0x6000, scoped, tag = 'output window, operand 0']
    %8 = vsyncpa [#allocation3], 0
    %s9 = scalar_lea.sflag [#allocation3], 1
    %10 = vsyncpa %s9, 0
    %11 = vsyncpa [#allocation4], 0
    %s12 = scalar_lea.sflag [#allocation4], 1
    %13 = vsyncpa %s12, 0
    loop: start=0, step=1, limit=8
    $region2: #{attention2weights_forward.1} parent=1 // loop_pre_header
      _
    $region3: #{attention2weights_forward.1} parent=1 // loop_header
      %s15 = sphi 0, %s19
      %p16 = scmp.ge.s32.totalorder %s15, 8
      %s23 = sphi 0, %s23
      %s25 = sphi 0, %s23
      %s26 = sphi 0, %s25
      %s40 = sphi 0, %s26
      %s46 = sphi 0, %s48
      %s49 = sphi 0, %s46
      %s50 = sphi 0, %s49
      %s66 = sphi 0, %s50
      %s72 = sphi 0, %s74
      %s75 = sphi 0, %s72
      %s76 = sphi 0, %s75
      %s92 = sphi 0, %s76
      %s98 = sphi 0, %s100
      %s101 = sphi 0, %s98
      %s102 = sphi 0, %s101
      %s118 = sphi 0, %s102
    $region4: #{attention2weights_forward.1} parent=1 // loop_header_branch
      %18 = sbr.rel (%p16) target = $region8
    $region5: #{attention2weights_forward.1} parent=1 // loop_body
      %s20 = ssub.s32 %s15, 1
      %s21 = ssub.s32 %s15, 2
      %s22 = sadd.s32 %s15, 1
      %s24 = sadd.s32 %s23, 1
      %p27 = scmp.eq.s32.totalorder %s15, 5
      %p28 = scmp.ne.s32.totalorder %s23, %s25
      %p29 = scmp.eq.s32.totalorder %s15, 0
      %p30 = por %p28, %p29
      %p31 = scmp.ne.s32.totalorder %s23, %s25
      %p32 = scmp.eq.s32.totalorder %s20, 5
      %p33 = por %p31, %p32
      %p34 = scmp.ne.s32.totalorder %s25, %s26
      %p35 = scmp.eq.s32.totalorder %s20, 0
      %p36 = por %p34, %p35
      %p37 = scmp.ne.s32.totalorder %s25, %s26
      %p38 = scmp.eq.s32.totalorder %s21, 5
      %p39 = por %p37, %p38
      %p41 = scmp.ne.s32.totalorder %s26, %s40
      %p42 = scmp.eq.s32.totalorder %s21, 0
      %p43 = por %p41, %p42
      %s44 = ssub.s32 %s15, %s22
      %p45 = scmp.eq.s32.totalorder %s44, 0
      %s47 = sadd.s32 %s46, 1
      %s48 = scalar_select %p45, %s46, %s47
      %p51 = pneg %p45
      %p52 = scmp.eq.s32.totalorder %s15, 5
      %p53 = por %p51, %p52
      %p54 = scmp.ne.s32.totalorder %s46, %s49
      %p55 = scmp.eq.s32.totalorder %s15, 0
      %p56 = por %p54, %p55
      %p57 = scmp.ne.s32.totalorder %s46, %s49
      %p58 = scmp.eq.s32.totalorder %s20, 5
      %p59 = por %p57, %p58
      %p60 = scmp.ne.s32.totalorder %s49, %s50
      %p61 = scmp.eq.s32.totalorder %s20, 0
      %p62 = por %p60, %p61
      %p63 = scmp.ne.s32.totalorder %s49, %s50
      %p64 = scmp.eq.s32.totalorder %s21, 5
      %p65 = por %p63, %p64
      %p67 = scmp.ne.s32.totalorder %s50, %s66
      %p68 = scmp.eq.s32.totalorder %s21, 0
      %p69 = por %p67, %p68
      %s70 = ssub.s32 %s15, %s22
      %p71 = scmp.eq.s32.totalorder %s70, 0
      %s73 = sadd.s32 %s72, 1
      %s74 = scalar_select %p71, %s72, %s73
      %p77 = pneg %p71
      %p78 = scmp.eq.s32.totalorder %s15, 5
      %p79 = por %p77, %p78
      %p80 = scmp.ne.s32.totalorder %s72, %s75
      %p81 = scmp.eq.s32.totalorder %s15, 0
      %p82 = por %p80, %p81
      %p83 = scmp.ne.s32.totalorder %s72, %s75
      %p84 = scmp.eq.s32.totalorder %s20, 5
      %p85 = por %p83, %p84
      %p86 = scmp.ne.s32.totalorder %s75, %s76
      %p87 = scmp.eq.s32.totalorder %s20, 0
      %p88 = por %p86, %p87
      %p89 = scmp.ne.s32.totalorder %s75, %s76
      %p90 = scmp.eq.s32.totalorder %s21, 5
      %p91 = por %p89, %p90
      %p93 = scmp.ne.s32.totalorder %s76, %s92
      %p94 = scmp.eq.s32.totalorder %s21, 0
      %p95 = por %p93, %p94
      %s96 = ssub.s32 %s15, %s22
      %p97 = scmp.eq.s32.totalorder %s96, 0
      %s99 = sadd.s32 %s98, 1
      %s100 = scalar_select %p97, %s98, %s99
      %p103 = pneg %p97
      %p104 = scmp.eq.s32.totalorder %s15, 5
      %p105 = por %p103, %p104
      %p106 = scmp.ne.s32.totalorder %s98, %s101
      %p107 = scmp.eq.s32.totalorder %s15, 0
      %p108 = por %p106, %p107
      %p109 = scmp.ne.s32.totalorder %s98, %s101
      %p110 = scmp.eq.s32.totalorder %s20, 5
      %p111 = por %p109, %p110
      %p112 = scmp.ne.s32.totalorder %s101, %s102
      %p113 = scmp.eq.s32.totalorder %s20, 0
      %p114 = por %p112, %p113
      %p115 = scmp.ne.s32.totalorder %s101, %s102
      %p116 = scmp.eq.s32.totalorder %s21, 5
      %p117 = por %p115, %p116
      %p119 = scmp.ne.s32.totalorder %s102, %s118
      %p120 = scmp.eq.s32.totalorder %s21, 0
      %p121 = por %p119, %p120
      %p122 = scmp.le.s32.totalorder 1, %s15
      %p123 = scmp.lt.s32.totalorder %s15, 7
      %p124 = pnand %p122, %p123
      %p125 = pneg %p124
      // Predicated region
      $region9: #{attention2weights_forward.1} parent=5 // pred_check
        _
      $region10: #{attention2weights_forward.1} parent=5 // pred_check_branch
        %127 = sbr.rel (%p124) target = $region12
      $region11: #{attention2weights_forward.1} parent=5 // pred_region
        %s128 = ssub.s32 %s15, 1
        // Predicated region
        $region13: #{attention2weights_forward.1} parent=11 // pred_check
          %p129 = pneg %p36
        $region14: #{attention2weights_forward.1} parent=11 // pred_check_branch
          %131 = sbr.rel (%p129) target = $region16
        $region15: #{attention2weights_forward.1} parent=11 // pred_region
          _
        $region16: #{attention2weights_forward.1} parent=11 // pred_fallthru
          _
      $region12: #{attention2weights_forward.1} parent=5 // pred_fallthru
        _
      %p132 = scmp.lt.s32.totalorder %s15, 6
      // Predicated region
      $region17: #{attention2weights_forward.1} parent=5 // pred_check
        %p133 = pneg %p132
      $region18: #{attention2weights_forward.1} parent=5 // pred_check_branch
        %135 = sbr.rel (%p133) target = $region20
      $region19: #{attention2weights_forward.1} parent=5 // pred_region
        // Predicated region
        $region21: #{attention2weights_forward.1} parent=19 // pred_check
          %p136 = pneg %p56
        $region22: #{attention2weights_forward.1} parent=19 // pred_check_branch
          %138 = sbr.rel (%p136) target = $region24
        $region23: #{attention2weights_forward.1} parent=19 // pred_region
          %s139 = sand.u32 %s46, 1
          %s140 = scalar_lea.sflag [#allocation3], %s139
          %s141 = sand.u32 %s46, 1
          %s142 = smul.addr %s141, 192
          %s143 = scalar_lea.vmem [#allocation2], %s142
          %s144 = smul.u32 3, %s15
          %s146 = ssub.s32 3072, 3072
          %147 = vsyncadd %s140, %s146
          %s148 = smul.addr %s144, 128
          %s149 = scalar_lea.hbm %s1, %s148
          %s150 = sshll.u32 %s143, 4
          %s151 = int_to_ptr.vmem [resolvable:$true] %s150
          %156 = dma.hbm_to_vmem [thread:$0]  %s149, 3072, %s151, %s140, 2304, 384, 24
        $region24: #{attention2weights_forward.1} parent=19 // pred_fallthru
          _
        // Predicated region
        $region25: #{attention2weights_forward.1} parent=19 // pred_check
          %p157 = pneg %p82
        $region26: #{attention2weights_forward.1} parent=19 // pred_check_branch
          %159 = sbr.rel (%p157) target = $region28
        $region27: #{attention2weights_forward.1} parent=19 // pred_region
          %s160 = smul.u32 3, %s15
          %p161 = scmp.lt.s32.totalorder %s160, 17
          %s162 = scalar_select %p161, %s160, 17
          %s163 = scalar_lea.vmem %s2, %s162
          %s164 = smul.u32 3, %s15
        $region28: #{attention2weights_forward.1} parent=19 // pred_fallthru
          _
      $region20: #{attention2weights_forward.1} parent=5 // pred_fallthru
        _
      %p165 = scmp.le.s32.totalorder 1, %s15
      %p166 = scmp.lt.s32.totalorder %s15, 7
      %p167 = pnand %p165, %p166
      %p168 = pneg %p167
      // Predicated region
      $region29: #{attention2weights_forward.1} parent=5 // pred_check
        _
      $region30: #{attention2weights_forward.1} parent=5 // pred_check_branch
        %170 = sbr.rel (%p167) target = $region32
      $region31: #{attention2weights_forward.1} parent=5 // pred_region
        %s171 = ssub.s32 %s15, 1
        %s172 = sand.u32 %s49, 1
        %s173 = scalar_lea.sflag [#allocation3], %s172
        %s174 = sand.u32 %s49, 1
        %s175 = smul.addr %s174, 192
        %s176 = scalar_lea.vmem [#allocation2], %s175
        // Predicated region
        $region33: #{attention2weights_forward.1} parent=31 // pred_check
          %p177 = pneg %p62
        $region34: #{attention2weights_forward.1} parent=31 // pred_check_branch
          %179 = sbr.rel (%p177) target = $region36
        $region35: #{attention2weights_forward.1} parent=31 // pred_region
          %180 = dma.done %s173, 3072
        $region36: #{attention2weights_forward.1} parent=31 // pred_fallthru
          _
        %p181 = pneg %p36
        %p182 = pneg %p33
        %s183 = sand.u32 %s49, 1
        %s184 = scalar_lea.sflag [#allocation3], %s183
        %s185 = sand.u32 %s49, 1
        %s186 = smul.addr %s185, 192
        %s187 = scalar_lea.vmem [#allocation2], %s186
        %p188 = pneg %p62
        %p189 = pneg %p59
        %s190 = smul.u32 3, %s20
        %p191 = scmp.lt.s32.totalorder %s190, 17
        %s192 = scalar_select %p191, %s190, 17
        %s193 = scalar_lea.vmem %s2, %s192
        %p194 = pneg %p88
        %p195 = pneg %p85
        %p196 = pneg %p114
        %p197 = pneg %p111
        %s198 = sand.u32 %s101, 1
        %s199 = scalar_lea.sflag [#allocation4], %s198
        %s200 = sand.u32 %s101, 1
        %s201 = smul.addr %s200, 24
        %s202 = scalar_lea.vmem [#allocation5], %s201
        %s203 = smul.u32 3, %s20
        %s204 = smul.u32 3, %s20
        %p205 = scmp.lt.s32.totalorder %s204, 17
        %s206 = scalar_select %p205, %s204, 17
        %s207 = scalar_lea.vmem %s2, %s206
        %s208 = smul.u32 3, %s20
        %s209 = smul.u32 3, %s20
        %v210 = vld [vmem:[%s0] sm:$0xff]
        %v211 = vld [vmem:[%s176] sm:$0xff]
        %v212 = vld [vmem:[%s176 + $0x8] sm:$0xff]
        %v213 = vld [vmem:[%s176 + $0x10] sm:$0xff]
        %v214 = vld [vmem:[%s176 + $0x18] sm:$0xff]
        %v215 = vld [vmem:[%s176 + $0x20] sm:$0xff]
        %v216 = vld [vmem:[%s176 + $0x28] sm:$0xff]
        %v217 = vld [vmem:[%s176 + $0x30] sm:$0xff]
        %v218 = vld [vmem:[%s176 + $0x38] sm:$0xff]
        %v219 = vld [vmem:[%s176 + $0x40] sm:$0xff]
        %v220 = vld [vmem:[%s176 + $0x48] sm:$0xff]
        %v221 = vld [vmem:[%s176 + $0x50] sm:$0xff]
        %v222 = vld [vmem:[%s176 + $0x58] sm:$0xff]
        %v223 = vld [vmem:[%s176 + $0x60] sm:$0xff]
        %v224 = vld [vmem:[%s176 + $0x68] sm:$0xff]
        %v225 = vld [vmem:[%s176 + $0x70] sm:$0xff]
        %v226 = vld [vmem:[%s176 + $0x78] sm:$0xff]
        %v227 = vld [vmem:[%s176 + $0x80] sm:$0xff]
        %v228 = vld [vmem:[%s176 + $0x88] sm:$0xff]
        %v229 = vld [vmem:[%s176 + $0x90] sm:$0xff]
        %v230 = vld [vmem:[%s176 + $0x98] sm:$0xff]
        %v231 = vld [vmem:[%s176 + $0xa0] sm:$0xff]
        %v232 = vld [vmem:[%s176 + $0xa8] sm:$0xff]
        %v233 = vld [vmem:[%s176 + $0xb0] sm:$0xff]
        %v234 = vld [vmem:[%s176 + $0xb8] sm:$0xff]
        %v235 = vld [vmem:[%s207] sm:$0x7]
        %v237 = vlaneseq
        %v238 = vshrl.u32 %v237, 7
        %v239 = vsub.s32 0, %v238
        %v240 = vrot.slane %v235, %v239
        %v241 = vlaneseq
        %v242 = vshrl.u32 %v241, 7
        %v243 = vsub.s32 1, %v242
        %v244 = vrot.slane %v235, %v243
        %v245 = vlaneseq
        %v246 = vshrl.u32 %v245, 7
        %v247 = vsub.s32 2, %v246
        %v248 = vrot.slane %v235, %v247
        %vm252 = vcmask 523264
        %v254 = vsel %vm252, %v210, 0
        %256 = vmatprep.subr.mxu0 %v212
        %257 = vmatpush1.msra.mxu0 %v211
        %258 = vmatprep.subr.mxu0 %v215
        %259 = vmatpush1.msra.mxu0 %v214
        %260 = vmatprep.subr.mxu0 %v218
        %261 = vmatpush1.msra.mxu0 %v217
        %262 = vmatprep.subr.mxu0 %v221
        %263 = vmatpush1.msra.mxu0 %v220
        %264 = vmatprep.subr.mxu0 %v224
        %265 = vmatpush1.msra.mxu0 %v223
        %266 = vmatprep.subr.mxu0 %v227
        %267 = vmatpush1.msra.mxu0 %v226
        %268 = vmatprep.subr.mxu0 %v230
        %269 = vmatpush1.msra.mxu0 %v229
        %270 = vmatprep.subr.mxu0 %v233
        %271 = vmatpush1.msra.mxu0 %v232
        %272 = vmatprep.subr.mxu0 0.0
        %273 = vmatpush1.msra.mxu0 0.0
        %274 = vmatprep.subr.mxu0 0.0
        %275 = vmatpush1.msra.mxu0 0.0
        %276 = vmatprep.subr.mxu0 0.0
        %277 = vmatpush1.msra.mxu0 0.0
        %278 = vmatprep.subr.mxu0 0.0
        %279 = vmatpush1.msra.mxu0 0.0
        %280 = vmatprep.subr.mxu0 0.0
        %281 = vmatpush1.msra.mxu0 0.0
        %282 = vmatprep.subr.mxu0 0.0
        %283 = vmatpush1.msra.mxu0 0.0
        %284 = vmatprep.subr.mxu0 0.0
        %285 = vmatpush1.msra.mxu0 0.0
        %286 = vmatprep.subr.mxu0 0.0
        %287 = vmatpush1.msra.mxu0 0.0
        %288 = vmatprep.subr.mxu0 0.0
        %289 = vmatpush1.msra.mxu0 0.0
        %290 = vmatprep.subr.mxu0 0.0
        %291 = vmatpush1.msra.mxu0 0.0
        %292 = vmatprep.subr.mxu0 0.0
        %293 = vmatpush1.msra.mxu0 0.0
        %294 = vmatprep.subr.mxu0 0.0
        %295 = vmatpush1.msra.mxu0 0.0
        %296 = vmatprep.subr.mxu0 0.0
        %297 = vmatpush1.msra.mxu0 0.0
        %298 = vmatprep.subr.mxu0 0.0
        %299 = vmatpush1.msra.mxu0 0.0
        %300 = vmatprep.subr.mxu0 0.0
        %301 = vmatpush1.msra.mxu0 0.0
        %302 = vmatprep.subr.mxu0 0.0
        %303 = vmatpush1.msra.mxu0 0.0
        %304 = vmatprep.subr.mxu0 0.0
        %305 = vmatpush1.msra.mxu0 0.0
        %306 = vmatprep.subr.mxu0 0.0
        %307 = vmatpush1.msra.mxu0 0.0
        %308 = vmatprep.subr.mxu0 0.0
        %309 = vmatpush1.msra.mxu0 0.0
        %310 = vmatprep.subr.mxu0 0.0
        %311 = vmatpush1.msra.mxu0 0.0
        %312 = vmatprep.subr.mxu0 0.0
        %313 = vmatpush1.msra.mxu0 0.0
        %314 = vmatprep.subr.mxu0 0.0
        %315 = vmatpush1.msra.mxu0 0.0
        %316 = vmatprep.subr.mxu0 0.0
        %317 = vmatpush1.msra.mxu0 0.0
        %318 = vmatprep.subr.mxu0 0.0
        %319 = vmatpush1.msra.mxu0 0.0
        %320 = vmatprep.mubr.f32.mxu0 0.0
        %321 = vmatmul.mubr.f32.gmra.mrb[0].mxu0 %v254
        %v322 = vpop.f32.mrb[0].mxu0
        %v323 = vadd.f32 %v240, %v322
        %v324 = vpop.f32.mrb[0].mxu0
        %v325 = vadd.f32 %v244, %v324
        %326 = vdwg.mxu0
        %327 = vmatprep.subr.mxu0 0.0
        %328 = vmatpush1.msra.mxu0 %v213
        %329 = vmatprep.subr.mxu0 0.0
        %330 = vmatpush1.msra.mxu0 %v216
        %331 = vmatprep.subr.mxu0 0.0
        %332 = vmatpush1.msra.mxu0 %v219
        %333 = vmatprep.subr.mxu0 0.0
        %334 = vmatpush1.msra.mxu0 %v222
        %335 = vmatprep.subr.mxu0 0.0
        %336 = vmatpush1.msra.mxu0 %v225
        %337 = vmatprep.subr.mxu0 0.0
        %338 = vmatpush1.msra.mxu0 %v228
        %339 = vmatprep.subr.mxu0 0.0
        %340 = vmatpush1.msra.mxu0 %v231
        %341 = vmatprep.subr.mxu0 0.0
        %342 = vmatpush1.msra.mxu0 %v234
        %343 = vmatprep.subr.mxu0 0.0
        %344 = vmatpush1.msra.mxu0 0.0
        %345 = vmatprep.subr.mxu0 0.0
        %346 = vmatpush1.msra.mxu0 0.0
        %347 = vmatprep.subr.mxu0 0.0
        %348 = vmatpush1.msra.mxu0 0.0
        %349 = vmatprep.subr.mxu0 0.0
        %350 = vmatpush1.msra.mxu0 0.0
        %351 = vmatprep.subr.mxu0 0.0
        %352 = vmatpush1.msra.mxu0 0.0
        %353 = vmatprep.subr.mxu0 0.0
        %354 = vmatpush1.msra.mxu0 0.0
        %355 = vmatprep.subr.mxu0 0.0
        %356 = vmatpush1.msra.mxu0 0.0
        %357 = vmatprep.subr.mxu0 0.0
        %358 = vmatpush1.msra.mxu0 0.0
        %359 = vmatprep.subr.mxu0 0.0
        %360 = vmatpush1.msra.mxu0 0.0
        %361 = vmatprep.subr.mxu0 0.0
        %362 = vmatpush1.msra.mxu0 0.0
        %363 = vmatprep.subr.mxu0 0.0
        %364 = vmatpush1.msra.mxu0 0.0
        %365 = vmatprep.subr.mxu0 0.0
        %366 = vmatpush1.msra.mxu0 0.0
        %367 = vmatprep.subr.mxu0 0.0
        %368 = vmatpush1.msra.mxu0 0.0
        %369 = vmatprep.subr.mxu0 0.0
        %370 = vmatpush1.msra.mxu0 0.0
        %371 = vmatprep.subr.mxu0 0.0
        %372 = vmatpush1.msra.mxu0 0.0
        %373 = vmatprep.subr.mxu0 0.0
        %374 = vmatpush1.msra.mxu0 0.0
        %375 = vmatprep.subr.mxu0 0.0
        %376 = vmatpush1.msra.mxu0 0.0
        %377 = vmatprep.subr.mxu0 0.0
        %378 = vmatpush1.msra.mxu0 0.0
        %379 = vmatprep.subr.mxu0 0.0
        %380 = vmatpush1.msra.mxu0 0.0
        %381 = vmatprep.subr.mxu0 0.0
        %382 = vmatpush1.msra.mxu0 0.0
        %383 = vmatprep.subr.mxu0 0.0
        %384 = vmatpush1.msra.mxu0 0.0
        %385 = vmatprep.subr.mxu0 0.0
        %386 = vmatpush1.msra.mxu0 0.0
        %387 = vmatprep.subr.mxu0 0.0
        %388 = vmatpush1.msra.mxu0 0.0
        %389 = vmatprep.subr.mxu0 0.0
        %390 = vmatpush1.msra.mxu0 0.0
        %391 = vmatprep.mubr.f32.mxu0 0.0
        %392 = vmatmul.mubr.f32.gmra.mrb[0].mxu0 %v254
        %v393 = vpop.f32.mrb[0].mxu0
        %v394 = vadd.f32 %v248, %v393
        %v395 = vpop.f32.mrb[0].mxu0
        %396 = vdwg.mxu0
        %397 = vst [vmem:[%s202] sm:$0xff] %v323
        %398 = vst [vmem:[%s202 + $0x8] sm:$0xff] %v325
        %399 = vst [vmem:[%s202 + $0x10] sm:$0xff] %v394
        %s400 = sand.u32 %s101, 1
        %s401 = scalar_lea.sflag [#allocation4], %s400
        %s402 = sand.u32 %s101, 1
        %s403 = smul.addr %s402, 24
        %s404 = scalar_lea.vmem [#allocation5], %s403
        // Predicated region
        $region37: #{attention2weights_forward.1} parent=31 // pred_check
          %p405 = pneg %p111
        $region38: #{attention2weights_forward.1} parent=31 // pred_check_branch
          %407 = sbr.rel (%p405) target = $region40
        $region39: #{attention2weights_forward.1} parent=31 // pred_region
          %s408 = smul.u32 3, %s20
          %s410 = ssub.s32 384, 384
          %411 = vsyncadd %s401, %s410
          %s412 = smul.addr %s408, 128
          %s413 = scalar_lea.hbm %s3, %s412
          %s415 = sshll.u32 %s404, 4
          %s416 = int_to_ptr.vmem [resolvable:$true] %s415
          %418 = dma.vmem_to_hbm [thread:$0]  %s416, 384, %s413, %s401
        $region40: #{attention2weights_forward.1} parent=31 // pred_fallthru
          _
      $region32: #{attention2weights_forward.1} parent=5 // pred_fallthru
        _
      %p419 = scmp.le.s32.totalorder 2, %s15
      // Predicated region
      $region41: #{attention2weights_forward.1} parent=5 // pred_check
        %p420 = pneg %p419
      $region42: #{attention2weights_forward.1} parent=5 // pred_check_branch
        %422 = sbr.rel (%p420) target = $region44
      $region43: #{attention2weights_forward.1} parent=5 // pred_region
        %s423 = ssub.s32 %s15, 2
        // Predicated region
        $region45: #{attention2weights_forward.1} parent=43 // pred_check
          %p424 = pneg %p117
        $region46: #{attention2weights_forward.1} parent=43 // pred_check_branch
          %426 = sbr.rel (%p424) target = $region48
        $region47: #{attention2weights_forward.1} parent=43 // pred_region
          %s427 = sand.u32 %s102, 1
          %s428 = scalar_lea.sflag [#allocation4], %s427
          %s429 = sand.u32 %s102, 1
          %s430 = smul.addr %s429, 24
          %s431 = scalar_lea.vmem [#allocation5], %s430
          %432 = dma.done %s428, 384
        $region48: #{attention2weights_forward.1} parent=43 // pred_fallthru
          _
      $region44: #{attention2weights_forward.1} parent=5 // pred_fallthru
        _
    $region6: #{attention2weights_forward.1} parent=1 // loop_footer
      %s19 = sadd.s32 1, %s15
    $region7: #{attention2weights_forward.1} parent=1 // loop_footer_branch
      %14 = sbr.rel target = $region3
    $region8: #{attention2weights_forward.1} parent=1 // loop_exit
      _
    %433 = vsyncpa [#allocation3], 1
    %s434 = scalar_lea.sflag [#allocation3], 1
    %435 = vsyncpa %s434, 1
    %436 = vsyncpa [#allocation4], 1
    %s437 = scalar_lea.sflag [#allocation4], 1
    %438 = vsyncpa %s437, 1

</llo_original>
